<compile_context>
chip_gen: v6e
topology: v6e:2x2x1
jax: 0.10.0
libtpu: 0.0.40
codegen_flags: <defaults>
</compile_context>

<pallas_src>
import jax
import jax.numpy as jnp
from jax.experimental import pallas as pl
from jax.experimental.pallas import tpu as pltpu


def _round_up(n, m):
    return ((n + m - 1) // m) * m


def _critic_kernel(x_ref, state_ref, w_ih_ref, w_hh_ref, b_h_ref,
                   w_out_ref, b_out_ref, value_ref, new_state_ref):
    # Recurrent cell: two MXU dots accumulated in f32 (no lane-concat copy).
    pre = jnp.dot(x_ref[...], w_ih_ref[...],
                  preferred_element_type=jnp.float32)
    pre = pre + jnp.dot(state_ref[...].astype(jnp.bfloat16), w_hh_ref[...],
                        preferred_element_type=jnp.float32)
    pre = pre + b_h_ref[...]          # f32 bias broadcast over batch
    new_state = jnp.tanh(pre)         # EUP transcendental, f32

    # Value head: value = new_state @ W_out + b_out.
    value = jnp.dot(new_state.astype(jnp.bfloat16), w_out_ref[...],
                    preferred_element_type=jnp.float32)
    value = value + b_out_ref[...]

    value_ref[...] = value
    new_state_ref[...] = new_state


@jax.jit
def critic_forward(x, state, params):
    """Fused Critic forward pass.

    x:      [B, D]  float32 input features
    state:  [B, H]  float32 recurrent state
    params: dict with w_ih [D,H], w_hh [H,H], b_h [1,H], w_out [H,V], b_out [1,V]
    returns (value [B, V] f32, new_state [B, H] f32)
    """
    B, D = x.shape
    H = state.shape[1]
    V = params["w_out"].shape[1]

    # Lane-/sublane-friendly padded sizes.
    Dp = _round_up(D, 128)
    Hp = _round_up(H, 128)
    Vp = _round_up(V, 128)
    if B <= 256:
        TB = _round_up(B, 16)     # bf16 sublane packing
        Bp = TB
    else:
        TB = 256                  # per-core batch tile (v7x megacore sharding)
        Bp = _round_up(B, TB)
    nb = Bp // TB

    f32, bf16 = jnp.float32, jnp.bfloat16

    # Pad activations (zeros in padded lanes/rows keep the math exact).
    x_p = jnp.zeros((Bp, Dp), bf16).at[:B, :D].set(x.astype(bf16))
    state_p = jnp.zeros((Bp, Hp), f32).at[:B, :H].set(state.astype(f32))

    w_ih_p = jnp.zeros((Dp, Hp), bf16).at[:D, :H].set(params["w_ih"].astype(bf16))
    w_hh_p = jnp.zeros((Hp, Hp), bf16).at[:H, :H].set(params["w_hh"].astype(bf16))
    b_h_p = jnp.zeros((1, Hp), f32).at[:, :H].set(params["b_h"].astype(f32))
    w_out_p = jnp.zeros((Hp, Vp), bf16).at[:H, :V].set(params["w_out"].astype(bf16))
    b_out_p = jnp.zeros((1, Vp), f32).at[:, :V].set(params["b_out"].astype(f32))

    cost = pl.CostEstimate(
        flops=2 * Bp * (Dp * Hp + Hp * Hp + Hp * Vp),
        transcendentals=Bp * Hp,
        bytes_accessed=(Bp * Dp * 2 + Bp * Hp * 4            # x, state in
                        + Dp * Hp * 2 + Hp * Hp * 2 + Hp * 4  # w_ih, w_hh, b_h
                        + Hp * Vp * 2 + Vp * 4               # w_out, b_out
                        + Bp * Vp * 4 + Bp * Hp * 4),        # value, new_state
    )

    value_p, new_state_p = pl.pallas_call(
        _critic_kernel,
        out_shape=(
            jax.ShapeDtypeStruct((Bp, Vp), f32),
            jax.ShapeDtypeStruct((Bp, Hp), f32),
        ),
        grid=(nb,),
        in_specs=[
            pl.BlockSpec((TB, Dp), lambda b: (b, 0)),          # x (batch-tiled)
            pl.BlockSpec((TB, Hp), lambda b: (b, 0)),          # state
            pl.BlockSpec((Dp, Hp), lambda b: (0, 0)),          # W_ih (resident)
            pl.BlockSpec((Hp, Hp), lambda b: (0, 0)),          # W_hh (resident)
            pl.BlockSpec((1, Hp), lambda b: (0, 0)),           # b_h
            pl.BlockSpec((Hp, Vp), lambda b: (0, 0)),          # W_out (resident)
            pl.BlockSpec((1, Vp), lambda b: (0, 0)),           # b_out
        ],
        out_specs=(
            pl.BlockSpec((TB, Vp), lambda b: (b, 0)),          # value
            pl.BlockSpec((TB, Hp), lambda b: (b, 0)),          # new_state
        ),
        # Reuse the state HBM buffer for new_state (no second [B,H] allocation).
        input_output_aliases={1: 1},
        compiler_params=pltpu.CompilerParams(
            dimension_semantics=("parallel",)),
        cost_estimate=cost,
    )(x_p, state_p, w_ih_p, w_hh_p, b_h_p, w_out_p, b_out_p)

    # Un-pad to the caller's logical shapes.
    return value_p[:B, :V], new_state_p[:B, :H]


def init_params(key, input_size, state_size, num_value):
    k1, k2, k3, k4, k5 = jax.random.split(key, 5)
    scale = 0.1
    return {
        "w_ih": scale * jax.random.normal(k1, (input_size, state_size), jnp.float32),
        "w_hh": scale * jax.random.normal(k2, (state_size, state_size), jnp.float32),
        "b_h": scale * jax.random.normal(k3, (1, state_size), jnp.float32),
        "w_out": scale * jax.random.normal(k4, (state_size, num_value), jnp.float32),
        "b_out": scale * jax.random.normal(k5, (1, num_value), jnp.float32),
    }


if __name__ == "__main__":
    # Small shapes consistent with the module; the wrapper pads to TPU-friendly
    # (lane=128 / sublane=16) sizes internally.
    batch = 8
    input_size = 32
    state_size = 32
    num_value = 8

    key = jax.random.PRNGKey(0)
    kx, ks, kp = jax.random.split(key, 3)

    x = jax.random.normal(kx, (batch, input_size), jnp.float32)
    state = jax.random.normal(ks, (batch, state_size), jnp.float32)
    params = init_params(kp, input_size, state_size, num_value)

    value, new_state = critic_forward(x, state, params)
    jax.block_until_ready((value, new_state))

    # Pure-JAX f32 reference (kernel uses bf16 matmul operands -> looser tol).
    ref_state = jnp.tanh(x @ params["w_ih"] + state @ params["w_hh"] + params["b_h"])
    ref_value = ref_state @ params["w_out"] + params["b_out"]

    assert value.shape == (batch, num_value)
    assert new_state.shape == (batch, state_size)
    assert jnp.allclose(new_state, ref_state, atol=2e-2), "new_state mismatch"
    assert jnp.allclose(value, ref_value, atol=3e-2), "value mismatch"

    print("KERNEL_OK")
</pallas_src>

<mosaic_0001>
module attributes {stable_mosaic.version = 11 : i64} {
  func.func @_critic_kernel(%arg0: i32, %arg1: memref<16x128xbf16, #tpu.memory_space<vmem>>, %arg2: memref<16x128xf32, #tpu.memory_space<vmem>>, %arg3: memref<128x128xbf16, #tpu.memory_space<vmem>>, %arg4: memref<128x128xbf16, #tpu.memory_space<vmem>>, %arg5: memref<1x128xf32, #tpu.memory_space<vmem>>, %arg6: memref<128x128xbf16, #tpu.memory_space<vmem>>, %arg7: memref<1x128xf32, #tpu.memory_space<vmem>>, %arg8: memref<16x128xf32, #tpu.memory_space<vmem>>, %arg9: memref<16x128xf32, #tpu.memory_space<vmem>>) attributes {dimension_semantics = [#tpu.dimension_semantics<parallel>], iteration_bounds = array<i64: 1>, scalar_prefetch = 0 : i64, scratch_operands = 0 : i64, tpu.core_type = #tpu.core_type<tc>, window_params = [{transform_indices = @transform_0, window_bounds = array<i64: 16, 128>}, {transform_indices = @transform_1, window_bounds = array<i64: 16, 128>}, {pipeline_mode = #tpu.pipeline_mode<synchronous>, transform_indices = @transform_2, window_bounds = array<i64: 128, 128>}, {pipeline_mode = #tpu.pipeline_mode<synchronous>, transform_indices = @transform_3, window_bounds = array<i64: 128, 128>}, {pipeline_mode = #tpu.pipeline_mode<synchronous>, transform_indices = @transform_4, window_bounds = array<i64: 1, 128>}, {pipeline_mode = #tpu.pipeline_mode<synchronous>, transform_indices = @transform_5, window_bounds = array<i64: 128, 128>}, {pipeline_mode = #tpu.pipeline_mode<synchronous>, transform_indices = @transform_6, window_bounds = array<i64: 1, 128>}, {transform_indices = @transform_7, window_bounds = array<i64: 16, 128>}, {transform_indices = @transform_8, window_bounds = array<i64: 16, 128>}]} {
    %c0 = arith.constant 0 : index
    %c0_0 = arith.constant 0 : index
    %0 = vector.load %arg1[%c0, %c0_0] : memref<16x128xbf16, #tpu.memory_space<vmem>>, vector<16x128xbf16>
    %c0_1 = arith.constant 0 : index
    %c0_2 = arith.constant 0 : index
    %1 = vector.load %arg3[%c0_1, %c0_2] : memref<128x128xbf16, #tpu.memory_space<vmem>>, vector<128x128xbf16>
    %cst = arith.constant dense<0.000000e+00> : vector<16x128xf32>
    %2 = tpu.matmul %0, %1, %cst {dimension_numbers = #tpu.dot_dimension_numbers<[1], [0], [0], [1], [0, 0, 1, 1], [], []>} : vector<16x128xbf16>, vector<128x128xbf16>, vector<16x128xf32> -> vector<16x128xf32>
    %c0_3 = arith.constant 0 : index
    %c0_4 = arith.constant 0 : index
    %3 = vector.load %arg2[%c0_3, %c0_4] : memref<16x128xf32, #tpu.memory_space<vmem>>, vector<16x128xf32>
    %4 = arith.truncf %3 : vector<16x128xf32> to vector<16x128xbf16>
    %c0_5 = arith.constant 0 : index
    %c0_6 = arith.constant 0 : index
    %5 = vector.load %arg4[%c0_5, %c0_6] : memref<128x128xbf16, #tpu.memory_space<vmem>>, vector<128x128xbf16>
    %cst_7 = arith.constant dense<0.000000e+00> : vector<16x128xf32>
    %6 = tpu.matmul %4, %5, %cst_7 {dimension_numbers = #tpu.dot_dimension_numbers<[1], [0], [0], [1], [0, 0, 1, 1], [], []>} : vector<16x128xbf16>, vector<128x128xbf16>, vector<16x128xf32> -> vector<16x128xf32>
    %7 = arith.addf %2, %6 : vector<16x128xf32>
    %c0_8 = arith.constant 0 : index
    %c0_9 = arith.constant 0 : index
    %8 = vector.load %arg5[%c0_8, %c0_9] : memref<1x128xf32, #tpu.memory_space<vmem>>, vector<1x128xf32>
    %9 = vector.broadcast %8 : vector<1x128xf32> to vector<16x128xf32>
    %10 = arith.addf %7, %9 : vector<16x128xf32>
    %11 = math.tanh %10 : vector<16x128xf32>
    %12 = arith.truncf %11 : vector<16x128xf32> to vector<16x128xbf16>
    %c0_10 = arith.constant 0 : index
    %c0_11 = arith.constant 0 : index
    %13 = vector.load %arg6[%c0_10, %c0_11] : memref<128x128xbf16, #tpu.memory_space<vmem>>, vector<128x128xbf16>
    %cst_12 = arith.constant dense<0.000000e+00> : vector<16x128xf32>
    %14 = tpu.matmul %12, %13, %cst_12 {dimension_numbers = #tpu.dot_dimension_numbers<[1], [0], [0], [1], [0, 0, 1, 1], [], []>} : vector<16x128xbf16>, vector<128x128xbf16>, vector<16x128xf32> -> vector<16x128xf32>
    %c0_13 = arith.constant 0 : index
    %c0_14 = arith.constant 0 : index
    %15 = vector.load %arg7[%c0_13, %c0_14] : memref<1x128xf32, #tpu.memory_space<vmem>>, vector<1x128xf32>
    %16 = vector.broadcast %15 : vector<1x128xf32> to vector<16x128xf32>
    %17 = arith.addf %14, %16 : vector<16x128xf32>
    %c0_15 = arith.constant 0 : index
    %c0_16 = arith.constant 0 : index
    %18 = vector.load %arg8[%c0_15, %c0_16] : memref<16x128xf32, #tpu.memory_space<vmem>>, vector<16x128xf32>
    tpu.vector_store %arg8[%c0_15, %c0_16], %17 {strides = array<i32>} : memref<16x128xf32, #tpu.memory_space<vmem>>, vector<16x128xf32>,
    %c0_17 = arith.constant 0 : index
    %c0_18 = arith.constant 0 : index
    %19 = vector.load %arg9[%c0_17, %c0_18] : memref<16x128xf32, #tpu.memory_space<vmem>>, vector<16x128xf32>
    tpu.vector_store %arg9[%c0_17, %c0_18], %11 {strides = array<i32>} : memref<16x128xf32, #tpu.memory_space<vmem>>, vector<16x128xf32>,
    return
  }
  func.func @transform_0(%arg0: i32) -> (i32, i32) {
    %c0_i32 = arith.constant 0 : i32
    %c0_i32_0 = arith.constant 0 : i32
    return %arg0, %c0_i32 : i32, i32
  }
  func.func @transform_1(%arg0: i32) -> (i32, i32) {
    %c0_i32 = arith.constant 0 : i32
    %c0_i32_0 = arith.constant 0 : i32
    return %arg0, %c0_i32 : i32, i32
  }
  func.func @transform_2(%arg0: i32) -> (i32, i32) {
    %c0_i32 = arith.constant 0 : i32
    %c0_i32_0 = arith.constant 0 : i32
    %c0_i32_1 = arith.constant 0 : i32
    return %c0_i32, %c0_i32_0 : i32, i32
  }
  func.func @transform_3(%arg0: i32) -> (i32, i32) {
    %c0_i32 = arith.constant 0 : i32
    %c0_i32_0 = arith.constant 0 : i32
    %c0_i32_1 = arith.constant 0 : i32
    return %c0_i32, %c0_i32_0 : i32, i32
  }
  func.func @transform_4(%arg0: i32) -> (i32, i32) {
    %c0_i32 = arith.constant 0 : i32
    %c0_i32_0 = arith.constant 0 : i32
    %c0_i32_1 = arith.constant 0 : i32
    return %c0_i32, %c0_i32_0 : i32, i32
  }
  func.func @transform_5(%arg0: i32) -> (i32, i32) {
    %c0_i32 = arith.constant 0 : i32
    %c0_i32_0 = arith.constant 0 : i32
    %c0_i32_1 = arith.constant 0 : i32
    return %c0_i32, %c0_i32_0 : i32, i32
  }
  func.func @transform_6(%arg0: i32) -> (i32, i32) {
    %c0_i32 = arith.constant 0 : i32
    %c0_i32_0 = arith.constant 0 : i32
    %c0_i32_1 = arith.constant 0 : i32
    return %c0_i32, %c0_i32_0 : i32, i32
  }
  func.func @transform_7(%arg0: i32) -> (i32, i32) {
    %c0_i32 = arith.constant 0 : i32
    %c0_i32_0 = arith.constant 0 : i32
    return %arg0, %c0_i32 : i32, i32
  }
  func.func @transform_8(%arg0: i32) -> (i32, i32) {
    %c0_i32 = arith.constant 0 : i32
    %c0_i32_0 = arith.constant 0 : i32
    return %arg0, %c0_i32 : i32, i32
  }
}

</mosaic_0001>

<llo_original>
// kernel: critic_forward.1
$region0: #{critic_forward.1}
  #allocation0 [shape = 'u32[]', space=smem, size = 0x4, offset = 0x4, fixed_abs, tag = 'smem constant byte address 0x4 - core index']
  #allocation1 [shape = 'u32[144,128]{1,0:T(1,128)}', space=vmem, size = 0x12000, scoped, tag = 'internal scratch']
  %s0 = inlined_call_operand.vmem [shape: bf16[16,128], index: 0, kind: input, shape index: {}]
  %s1 = inlined_call_operand.vmem [shape: f32[16,128], index: 1, kind: input, shape index: {}, may-alias: {1,8}]
  %s2 = inlined_call_operand.vmem [shape: bf16[128,128], index: 2, kind: input, shape index: {}]
  %s3 = inlined_call_operand.vmem [shape: bf16[128,128], index: 3, kind: input, shape index: {}]
  %s4 = inlined_call_operand.vmem [shape: f32[1,128], index: 4, kind: input, shape index: {}]
  %s5 = inlined_call_operand.vmem [shape: bf16[128,128], index: 5, kind: input, shape index: {}]
  %s6 = inlined_call_operand.vmem [shape: f32[1,128], index: 6, kind: input, shape index: {}]
  %s7 = inlined_call_operand.vmem [shape: f32[16,128], index: 7, kind: output, shape index: {0}]
  %s8 = inlined_call_operand.vmem [shape: f32[16,128], index: 8, kind: output, shape index: {1}, may-alias: {1,8}]
  %9 = xla_tuple %s7, %s8
  %s10 = sld [smem:[#allocation0]]
  $region46: #{critic_forward.1} parent=0
    _
  %s12 = ssub.s32 1, %s10
  %s13 = scalar_select 0, %s12, %s10
  // Predicated region
  $region2: #{critic_forward.1} parent=0 // pred_check
    _
  $region3: #{critic_forward.1} parent=0 // pred_check_branch
    %15 = sbr.rel (0) target = $region5
  $region4: #{critic_forward.1} parent=0 // pred_region
    _
  $region5: #{critic_forward.1} parent=0 // pred_fallthru
    _
  // Predicated region
  $region6: #{critic_forward.1} parent=0 // pred_check
    _
  $region7: #{critic_forward.1} parent=0 // pred_check_branch
    %17 = sbr.rel (0) target = $region9
  $region8: #{critic_forward.1} parent=0 // pred_region
    _
  $region9: #{critic_forward.1} parent=0 // pred_fallthru
    _
  // Predicated region
  $region10: #{critic_forward.1} parent=0 // pred_check
    _
  $region11: #{critic_forward.1} parent=0 // pred_check_branch
    %19 = sbr.rel (0) target = $region13
  $region12: #{critic_forward.1} parent=0 // pred_region
    _
  $region13: #{critic_forward.1} parent=0 // pred_fallthru
    _
  // Predicated region
  $region14: #{critic_forward.1} parent=0 // pred_check
    _
  $region15: #{critic_forward.1} parent=0 // pred_check_branch
    %21 = sbr.rel (0) target = $region17
  $region16: #{critic_forward.1} parent=0 // pred_region
    _
  $region17: #{critic_forward.1} parent=0 // pred_fallthru
    _
  // Predicated region
  $region18: #{critic_forward.1} parent=0 // pred_check
    _
  $region19: #{critic_forward.1} parent=0 // pred_check_branch
    %23 = sbr.rel (0) target = $region21
  $region20: #{critic_forward.1} parent=0 // pred_region
    _
  $region21: #{critic_forward.1} parent=0 // pred_fallthru
    _
  // Predicated region
  $region22: #{critic_forward.1} parent=0 // pred_check
    _
  $region23: #{critic_forward.1} parent=0 // pred_check_branch
    %25 = sbr.rel (0) target = $region25
  $region24: #{critic_forward.1} parent=0 // pred_region
    _
  $region25: #{critic_forward.1} parent=0 // pred_fallthru
    _
  // Predicated region
  $region26: #{critic_forward.1} parent=0 // pred_check
    _
  $region27: #{critic_forward.1} parent=0 // pred_check_branch
    %27 = sbr.rel (0) target = $region29
  $region28: #{critic_forward.1} parent=0 // pred_region
    _
  $region29: #{critic_forward.1} parent=0 // pred_fallthru
    _
  %v29 = vld [vmem:[%s0] sm:$0xf]
  %v30 = vld [vmem:[%s0 + $0x4] sm:$0xf]
  %v31 = vld [vmem:[%s2] sm:$0xf]
  %v32 = vld [vmem:[%s2 + $0x4] sm:$0xf]
  %v33 = vld [vmem:[%s2 + $0x8] sm:$0xf]
  %v34 = vld [vmem:[%s2 + $0xc] sm:$0xf]
  %v35 = vld [vmem:[%s2 + $0x10] sm:$0xf]
  %v36 = vld [vmem:[%s2 + $0x14] sm:$0xf]
  %v37 = vld [vmem:[%s2 + $0x18] sm:$0xf]
  %v38 = vld [vmem:[%s2 + $0x1c] sm:$0xf]
  %v39 = vld [vmem:[%s2 + $0x20] sm:$0xf]
  %v40 = vld [vmem:[%s2 + $0x24] sm:$0xf]
  %v41 = vld [vmem:[%s2 + $0x28] sm:$0xf]
  %v42 = vld [vmem:[%s2 + $0x2c] sm:$0xf]
  %v43 = vld [vmem:[%s2 + $0x30] sm:$0xf]
  %v44 = vld [vmem:[%s2 + $0x34] sm:$0xf]
  %v45 = vld [vmem:[%s2 + $0x38] sm:$0xf]
  %v46 = vld [vmem:[%s2 + $0x3c] sm:$0xf]
  %v47 = vld [vmem:[%s1] sm:$0xff]
  %v48 = vld [vmem:[%s1 + $0x8] sm:$0xff]
  %v49 = vpack.c.bf16 %v48, %v47
  %v50 = vld [vmem:[%s3] sm:$0xf]
  %v51 = vld [vmem:[%s3 + $0x4] sm:$0xf]
  %v52 = vld [vmem:[%s3 + $0x8] sm:$0xf]
  %v53 = vld [vmem:[%s3 + $0xc] sm:$0xf]
  %v54 = vld [vmem:[%s3 + $0x10] sm:$0xf]
  %v55 = vld [vmem:[%s3 + $0x14] sm:$0xf]
  %v56 = vld [vmem:[%s3 + $0x18] sm:$0xf]
  %v57 = vld [vmem:[%s3 + $0x1c] sm:$0xf]
  %v58 = vld [vmem:[%s3 + $0x20] sm:$0xf]
  %v59 = vld [vmem:[%s3 + $0x24] sm:$0xf]
  %v60 = vld [vmem:[%s3 + $0x28] sm:$0xf]
  %v61 = vld [vmem:[%s3 + $0x2c] sm:$0xf]
  %v62 = vld [vmem:[%s3 + $0x30] sm:$0xf]
  %v63 = vld [vmem:[%s3 + $0x34] sm:$0xf]
  %v64 = vld [vmem:[%s3 + $0x38] sm:$0xf]
  %v65 = vld [vmem:[%s3 + $0x3c] sm:$0xf]
  %v82 = vunpack.c.l.b16 %v50
  %v83 = vunpack.c.l.b16 %v51
  %v84 = vunpack.c.l.b16 %v52
  %v85 = vunpack.c.l.b16 %v53
  %v86 = vunpack.c.l.b16 %v54
  %v87 = vunpack.c.l.b16 %v55
  %v88 = vunpack.c.l.b16 %v56
  %v89 = vunpack.c.l.b16 %v57
  %v90 = vunpack.c.l.b16 %v58
  %v91 = vunpack.c.l.b16 %v59
  %v92 = vunpack.c.l.b16 %v60
  %v93 = vunpack.c.l.b16 %v61
  %v94 = vunpack.c.l.b16 %v62
  %v95 = vunpack.c.l.b16 %v63
  %v96 = vunpack.c.l.b16 %v64
  %v97 = vunpack.c.l.b16 %v65
  %v98 = vpack.c.b16 %v83, %v82
  %v99 = vpack.c.b16 %v85, %v84
  %v100 = vpack.c.b16 %v87, %v86
  %v101 = vpack.c.b16 %v89, %v88
  %v102 = vpack.c.b16 %v91, %v90
  %v103 = vpack.c.b16 %v93, %v92
  %v104 = vpack.c.b16 %v95, %v94
  %v105 = vpack.c.b16 %v97, %v96
  %114 = vmatprep.subr.bf16.mxu0 0
  %115 = vmatpush1.bf16.msra.mxu0 %v105
  %116 = vmatprep.subr.bf16.mxu0 0
  %117 = vmatpush1.bf16.msra.mxu0 %v104
  %118 = vmatprep.subr.bf16.mxu0 0
  %119 = vmatpush1.bf16.msra.mxu0 %v103
  %120 = vmatprep.subr.bf16.mxu0 0
  %121 = vmatpush1.bf16.msra.mxu0 %v102
  %122 = vmatprep.subr.bf16.mxu0 0
  %123 = vmatpush1.bf16.msra.mxu0 %v101
  %124 = vmatprep.subr.bf16.mxu0 0
  %125 = vmatpush1.bf16.msra.mxu0 %v100
  %126 = vmatprep.subr.bf16.mxu0 0
  %127 = vmatpush1.bf16.msra.mxu0 %v99
  %128 = vmatprep.subr.bf16.mxu0 0
  %129 = vmatpush1.bf16.msra.mxu0 %v98
  %130 = vmatprep.subr.bf16.mxu0 0
  %131 = vmatpush2.bf16.msra.mxu0 0
  %132 = vmatprep.subr.bf16.mxu0 0
  %133 = vmatpush2.bf16.msra.mxu0 0
  %134 = vmatprep.subr.bf16.mxu0 0
  %135 = vmatpush2.bf16.msra.mxu0 0
  %136 = vmatprep.subr.bf16.mxu0 0
  %137 = vmatpush2.bf16.msra.mxu0 0
  %138 = vmatprep.subr.bf16.mxu0 0
  %139 = vmatpush2.bf16.msra.mxu0 0
  %140 = vmatprep.subr.bf16.mxu0 0
  %141 = vmatpush2.bf16.msra.mxu0 0
  %142 = vmatprep.subr.bf16.mxu0 0
  %143 = vmatpush2.bf16.msra.mxu0 0
  %144 = vmatprep.subr.bf16.mxu0 0
  %145 = vmatpush2.bf16.msra.mxu0 0
  %146 = vmatprep.mubr.bf16.mxu0 0
  %147 = vmatmul.mubr.bf16.gmra.mxu0 %v49
  %v148 = vpop.f32.mrf.mxu0
  %v149 = vadd.f32 0.0, %v148
  %v150 = vpop.f32.mrf.mxu0
  %v151 = vpop.f32.mrf.mxu0
  %v152 = vadd.f32 0.0, %v151
  %v153 = vpop.f32.mrf.mxu0
  %154 = vdwg.mxu0
  %v157 = vunpack.c.l.b16 %v29
  %v158 = vunpack.c.l.b16 %v30
  %v159 = vpack.c.b16 %v158, %v157
  %v177 = vunpack.c.l.b16 %v31
  %v178 = vunpack.c.l.b16 %v32
  %v179 = vunpack.c.l.b16 %v33
  %v180 = vunpack.c.l.b16 %v34
  %v181 = vunpack.c.l.b16 %v35
  %v182 = vunpack.c.l.b16 %v36
  %v183 = vunpack.c.l.b16 %v37
  %v184 = vunpack.c.l.b16 %v38
  %v185 = vunpack.c.l.b16 %v39
  %v186 = vunpack.c.l.b16 %v40
  %v187 = vunpack.c.l.b16 %v41
  %v188 = vunpack.c.l.b16 %v42
  %v189 = vunpack.c.l.b16 %v43
  %v190 = vunpack.c.l.b16 %v44
  %v191 = vunpack.c.l.b16 %v45
  %v192 = vunpack.c.l.b16 %v46
  %v193 = vpack.c.b16 %v178, %v177
  %v194 = vpack.c.b16 %v180, %v179
  %v195 = vpack.c.b16 %v182, %v181
  %v196 = vpack.c.b16 %v184, %v183
  %v197 = vpack.c.b16 %v186, %v185
  %v198 = vpack.c.b16 %v188, %v187
  %v199 = vpack.c.b16 %v190, %v189
  %v200 = vpack.c.b16 %v192, %v191
  %209 = vmatprep.subr.bf16.mxu0 0
  %210 = vmatpush1.bf16.msra.mxu0 %v200
  %211 = vmatprep.subr.bf16.mxu0 0
  %212 = vmatpush1.bf16.msra.mxu0 %v199
  %213 = vmatprep.subr.bf16.mxu0 0
  %214 = vmatpush1.bf16.msra.mxu0 %v198
  %215 = vmatprep.subr.bf16.mxu0 0
  %216 = vmatpush1.bf16.msra.mxu0 %v197
  %217 = vmatprep.subr.bf16.mxu0 0
  %218 = vmatpush1.bf16.msra.mxu0 %v196
  %219 = vmatprep.subr.bf16.mxu0 0
  %220 = vmatpush1.bf16.msra.mxu0 %v195
  %221 = vmatprep.subr.bf16.mxu0 0
  %222 = vmatpush1.bf16.msra.mxu0 %v194
  %223 = vmatprep.subr.bf16.mxu0 0
  %224 = vmatpush1.bf16.msra.mxu0 %v193
  %225 = vmatprep.subr.bf16.mxu0 0
  %226 = vmatpush2.bf16.msra.mxu0 0
  %227 = vmatprep.subr.bf16.mxu0 0
  %228 = vmatpush2.bf16.msra.mxu0 0
  %229 = vmatprep.subr.bf16.mxu0 0
  %230 = vmatpush2.bf16.msra.mxu0 0
  %231 = vmatprep.subr.bf16.mxu0 0
  %232 = vmatpush2.bf16.msra.mxu0 0
  %233 = vmatprep.subr.bf16.mxu0 0
  %234 = vmatpush2.bf16.msra.mxu0 0
  %235 = vmatprep.subr.bf16.mxu0 0
  %236 = vmatpush2.bf16.msra.mxu0 0
  %237 = vmatprep.subr.bf16.mxu0 0
  %238 = vmatpush2.bf16.msra.mxu0 0
  %239 = vmatprep.subr.bf16.mxu0 0
  %240 = vmatpush2.bf16.msra.mxu0 0
  %241 = vmatprep.mubr.bf16.mxu0 0
  %242 = vmatmul.mubr.bf16.gmra.mxu0 %v159
  %v243 = vpop.f32.mrf.mxu0
  %v244 = vadd.f32 %v149, %v243
  %v245 = vpop.f32.mrf.mxu0
  %v246 = vpop.f32.mrf.mxu0
  %v247 = vadd.f32 %v152, %v246
  %v248 = vpop.f32.mrf.mxu0
  %249 = vdwg.mxu0
  %v250 = vld [vmem:[%s4] sm:$0x1]
  %v252 = vlaneseq
  %v253 = vshrl.u32 %v252, 7
  %v254 = vsub.s32 0, %v253
  %v255 = vrot.slane %v250, %v254
  %v257 = vadd.f32 %v244, %v255
  %v258 = vadd.f32 %v247, %v255
  %v259 = vtanh.pop %v257
  %v260 = vtanh.pop %v258
  %v261 = vpack.c.bf16 %v260, %v259
  %v262 = vld [vmem:[%s5] sm:$0xf]
  %v263 = vld [vmem:[%s5 + $0x4] sm:$0xf]
  %v264 = vld [vmem:[%s5 + $0x8] sm:$0xf]
  %v265 = vld [vmem:[%s5 + $0xc] sm:$0xf]
  %v266 = vld [vmem:[%s5 + $0x10] sm:$0xf]
  %v267 = vld [vmem:[%s5 + $0x14] sm:$0xf]
  %v268 = vld [vmem:[%s5 + $0x18] sm:$0xf]
  %v269 = vld [vmem:[%s5 + $0x1c] sm:$0xf]
  %v270 = vld [vmem:[%s5 + $0x20] sm:$0xf]
  %v271 = vld [vmem:[%s5 + $0x24] sm:$0xf]
  %v272 = vld [vmem:[%s5 + $0x28] sm:$0xf]
  %v273 = vld [vmem:[%s5 + $0x2c] sm:$0xf]
  %v274 = vld [vmem:[%s5 + $0x30] sm:$0xf]
  %v275 = vld [vmem:[%s5 + $0x34] sm:$0xf]
  %v276 = vld [vmem:[%s5 + $0x38] sm:$0xf]
  %v277 = vld [vmem:[%s5 + $0x3c] sm:$0xf]
  %v278 = vld [vmem:[%s6] sm:$0x1]
  %v280 = vlaneseq
  %v281 = vshrl.u32 %v280, 7
  %v282 = vsub.s32 0, %v281
  %v283 = vrot.slane %v278, %v282
  %v301 = vunpack.c.l.b16 %v262
  %v302 = vunpack.c.l.b16 %v263
  %v303 = vunpack.c.l.b16 %v264
  %v304 = vunpack.c.l.b16 %v265
  %v305 = vunpack.c.l.b16 %v266
  %v306 = vunpack.c.l.b16 %v267
  %v307 = vunpack.c.l.b16 %v268
  %v308 = vunpack.c.l.b16 %v269
  %v309 = vunpack.c.l.b16 %v270
  %v310 = vunpack.c.l.b16 %v271
  %v311 = vunpack.c.l.b16 %v272
  %v312 = vunpack.c.l.b16 %v273
  %v313 = vunpack.c.l.b16 %v274
  %v314 = vunpack.c.l.b16 %v275
  %v315 = vunpack.c.l.b16 %v276
  %v316 = vunpack.c.l.b16 %v277
  %v317 = vpack.c.b16 %v302, %v301
  %v318 = vpack.c.b16 %v304, %v303
  %v319 = vpack.c.b16 %v306, %v305
  %v320 = vpack.c.b16 %v308, %v307
  %v321 = vpack.c.b16 %v310, %v309
  %v322 = vpack.c.b16 %v312, %v311
  %v323 = vpack.c.b16 %v314, %v313
  %v324 = vpack.c.b16 %v316, %v315
  %333 = vmatprep.subr.bf16.mxu0 0
  %334 = vmatpush1.bf16.msra.mxu0 %v324
  %335 = vmatprep.subr.bf16.mxu0 0
  %336 = vmatpush1.bf16.msra.mxu0 %v323
  %337 = vmatprep.subr.bf16.mxu0 0
  %338 = vmatpush1.bf16.msra.mxu0 %v322
  %339 = vmatprep.subr.bf16.mxu0 0
  %340 = vmatpush1.bf16.msra.mxu0 %v321
  %341 = vmatprep.subr.bf16.mxu0 0
  %342 = vmatpush1.bf16.msra.mxu0 %v320
  %343 = vmatprep.subr.bf16.mxu0 0
  %344 = vmatpush1.bf16.msra.mxu0 %v319
  %345 = vmatprep.subr.bf16.mxu0 0
  %346 = vmatpush1.bf16.msra.mxu0 %v318
  %347 = vmatprep.subr.bf16.mxu0 0
  %348 = vmatpush1.bf16.msra.mxu0 %v317
  %349 = vmatprep.subr.bf16.mxu0 0
  %350 = vmatpush2.bf16.msra.mxu0 0
  %351 = vmatprep.subr.bf16.mxu0 0
  %352 = vmatpush2.bf16.msra.mxu0 0
  %353 = vmatprep.subr.bf16.mxu0 0
  %354 = vmatpush2.bf16.msra.mxu0 0
  %355 = vmatprep.subr.bf16.mxu0 0
  %356 = vmatpush2.bf16.msra.mxu0 0
  %357 = vmatprep.subr.bf16.mxu0 0
  %358 = vmatpush2.bf16.msra.mxu0 0
  %359 = vmatprep.subr.bf16.mxu0 0
  %360 = vmatpush2.bf16.msra.mxu0 0
  %361 = vmatprep.subr.bf16.mxu0 0
  %362 = vmatpush2.bf16.msra.mxu0 0
  %363 = vmatprep.subr.bf16.mxu0 0
  %364 = vmatpush2.bf16.msra.mxu0 0
  %365 = vmatprep.mubr.bf16.mxu0 0
  %366 = vmatmul.mubr.bf16.gmra.mxu0 %v261
  %v367 = vpop.f32.mrf.mxu0
  %v368 = vadd.f32 %v283, %v367
  %v369 = vpop.f32.mrf.mxu0
  %v370 = vpop.f32.mrf.mxu0
  %v371 = vadd.f32 %v283, %v370
  %v372 = vpop.f32.mrf.mxu0
  %373 = vdwg.mxu0
  %374 = vst [vmem:[%s7] sm:$0xff] %v368
  %375 = vst [vmem:[%s7 + $0x8] sm:$0xff] %v371
  %376 = vst [vmem:[%s8] sm:$0xff] %v259
  %377 = vst [vmem:[%s8 + $0x8] sm:$0xff] %v260
  // Predicated region
  $region30: #{critic_forward.1} parent=0 // pred_check
    _
  $region31: #{critic_forward.1} parent=0 // pred_check_branch
    %379 = sbr.rel (0) target = $region33
  $region32: #{critic_forward.1} parent=0 // pred_region
    _
  $region33: #{critic_forward.1} parent=0 // pred_fallthru
    _
  // Predicated region
  $region34: #{critic_forward.1} parent=0 // pred_check
    _
  $region35: #{critic_forward.1} parent=0 // pred_check_branch
    %381 = sbr.rel (0) target = $region37
  $region36: #{critic_forward.1} parent=0 // pred_region
    _
  $region37: #{critic_forward.1} parent=0 // pred_fallthru
    _
  // Predicated region
  $region38: #{critic_forward.1} parent=0 // pred_check
    _
  $region39: #{critic_forward.1} parent=0 // pred_check_branch
    %383 = sbr.rel (0) target = $region41
  $region40: #{critic_forward.1} parent=0 // pred_region
    _
  $region41: #{critic_forward.1} parent=0 // pred_fallthru
    _
  // Predicated region
  $region42: #{critic_forward.1} parent=0 // pred_check
    _
  $region43: #{critic_forward.1} parent=0 // pred_check_branch
    %385 = sbr.rel (0) target = $region45
  $region44: #{critic_forward.1} parent=0 // pred_region
    _
  $region45: #{critic_forward.1} parent=0 // pred_fallthru
    _

</llo_original>
